<compile_context>
chip_gen: v7x
topology: tpu7x:2x2x1
jax: 0.10.0
libtpu: 0.0.40
codegen_flags: <defaults>
</compile_context>

<pallas_src>
import jax
import jax.numpy as jnp
from jax.experimental import pallas as pl
from jax.experimental.pallas import tpu as pltpu

LANES = 128
SUBLANES = 8
MAX_TILE_ROWS = 8192  # (8192, 128) f32 = 4 MiB per input block


def _make_rmsle_kernel(tile_rows, tiles_per_core, num_tiles, rows, num_cores):
    # Static (trace-time) facts about the tail / grid shape.
    rows_in_last = rows - (num_tiles - 1) * tile_rows      # in [8, tile_rows]
    needs_tail_mask = rows_in_last != tile_rows            # ragged last block?
    has_phantom = num_cores * tiles_per_core != num_tiles  # padded grid?

    def rmsle_kernel(pred_ref, true_ref, out_ref):
        t = pl.program_id(1)

        @pl.when(t == 0)
        def _():
            out_ref[...] = jnp.zeros_like(out_ref)

        def accumulate(valid=None):
            # clamp(pred, 0) -> log1p diff -> square: VPU + EUP work that
            # streams underneath the HBM DMA.
            p = jnp.maximum(pred_ref[...].astype(jnp.float32), 0.0)
            d = jnp.log1p(p) - jnp.log1p(true_ref[...].astype(jnp.float32))
            sq = d * d
            if valid is not None:
                # Select (not multiply): NaN/Inf from garbage rows of a ragged
                # last block is discarded, never propagated.
                sq = jnp.where(valid, sq, 0.0)
            # Layout-preserving fold into the resident (8,128) output block.
            # TODO(synk): if a bundle dump shows Mosaic materializing a VMEM
            # copy for this reshape, replace with an unrolled loop of
            # out_ref[...] += sq[pl.ds(i * SUBLANES, SUBLANES), :].
            out_ref[...] += sq.reshape(
                tile_rows // SUBLANES, SUBLANES, LANES
            ).sum(axis=0)

        if not (needs_tail_mask or has_phantom):
            # Steady state (and the whole kernel for aligned inputs): no mask.
            accumulate()
        else:
            c = pl.program_id(0)
            g = c * tiles_per_core + t            # global tile index
            last_g = num_tiles - 1

            if has_phantom and needs_tail_mask:
                interior = jnp.logical_and(g < num_tiles, g != last_g)
            elif has_phantom:
                interior = g < num_tiles
            else:
                interior = g != last_g

            @pl.when(interior)
            def _():
                accumulate()

            if needs_tail_mask:
                @pl.when(g == last_g)
                def _():
                    # Row-level validity only: sub-row raggedness was
                    # zero-padded in the wrapper and contributes exactly 0.
                    row = jax.lax.broadcasted_iota(
                        jnp.int32, (tile_rows, LANES), 0
                    )
                    accumulate(valid=row < rows_in_last)

    return rmsle_kernel


def rmsle_loss(y_pred: jax.Array, y_true: jax.Array, *,
               max_tile_rows: int = MAX_TILE_ROWS) -> jax.Array:
    """RMSLE loss matching PyTorch RMSLELoss.forward; returns an f32 scalar."""
    assert y_pred.shape == y_true.shape
    assert max_tile_rows % SUBLANES == 0 and max_tile_rows >= SUBLANES
    n = int(y_pred.size)
    assert n > 0

    # Pad the flat length up to a multiple of 8*128 so the (rows, 128) view has
    # rows % 8 == 0.  Zero padding contributes log1p(0)-log1p(0)=0, so no
    # element-level mask is ever needed.  Static check -> no copy when aligned
    # (the test shapes below are aligned).
    # TODO(synk): for unaligned n, process the <1024-element tail in a second
    # tiny call instead of jnp.pad'ing (full HBM copy) the whole tensor.
    granule = SUBLANES * LANES
    n_pad = ((n + granule - 1) // granule) * granule
    rows = n_pad // LANES

    tile_rows = min(max_tile_rows, rows)          # multiple of 8 by construction
    num_tiles = pl.cdiv(rows, tile_rows)

    # Leading "parallel" axis shards tiles across v7x's 2 TensorCores; it is a
    # sequential no-op on single-TC v5e/v6e.
    num_cores = 2 if num_tiles >= 2 else 1
    tiles_per_core = pl.cdiv(num_tiles, num_cores)

    def _prep(x):
        x = x.reshape(-1)
        if n_pad != n:
            x = jnp.pad(x, (0, n_pad - n))
        return x.reshape(rows, LANES)

    pred2d = _prep(y_pred)
    true2d = _prep(y_true)

    if num_cores * tiles_per_core == num_tiles:
        in_map = lambda c, t: (c * tiles_per_core + t, 0)
    else:
        # Clamp phantom (grid-padding) tiles onto the last real block; the
        # kernel skips their accumulation via pl.when(g < num_tiles).
        in_map = lambda c, t: (
            jnp.minimum(c * tiles_per_core + t, num_tiles - 1), 0)

    partials = pl.pallas_call(
        _make_rmsle_kernel(tile_rows, tiles_per_core, num_tiles, rows, num_cores),
        out_shape=jax.ShapeDtypeStruct((num_cores * SUBLANES, LANES), jnp.float32),
        grid=(num_cores, tiles_per_core),
        in_specs=[
            pl.BlockSpec((tile_rows, LANES), in_map),
            pl.BlockSpec((tile_rows, LANES), in_map),
        ],
        out_specs=pl.BlockSpec((SUBLANES, LANES), lambda c, t: (c, 0)),
        compiler_params=pltpu.CompilerParams(
            dimension_semantics=("parallel", "arbitrary"),
            # 2 inputs x 2 buffers x 4 MiB = 16 MiB pipeline + elementwise
            # temporaries; above v5e's 16 MiB default scope, below v7x's 64 MiB
            # physical VMEM.
            vmem_limit_bytes=40 * 1024 * 1024,
        ),
    )(pred2d, true2d)

    # Tiny epilogue (<= 2*8*128 floats): cross-core partial sum, mean, sqrt.
    return jnp.sqrt(jnp.sum(partials) / n)


def _reference(y_pred, y_true):
    p = jnp.maximum(y_pred.astype(jnp.float32), 0.0)
    d = jnp.log1p(p) - jnp.log1p(y_true.astype(jnp.float32))
    return jnp.sqrt(jnp.mean(d * d))


if __name__ == "__main__":
    key = jax.random.PRNGKey(0)
    k1, k2, k3, k4 = jax.random.split(key, 4)

    # Small representative shape (a batch of per-pixel regressions).
    shape = (2, 4, 16, 16)
    # y_pred may be negative (gets clamped); y_true non-negative as RMSLE expects.
    y_pred = jax.random.normal(k1, shape, dtype=jnp.float32) * 2.0
    y_true = jax.random.uniform(k2, shape, dtype=jnp.float32, minval=0.0, maxval=5.0)

    loss = rmsle_loss(y_pred, y_true)
    jax.block_until_ready(loss)
    ref = _reference(y_pred, y_true)
    assert jnp.allclose(loss, ref, rtol=1e-5, atol=1e-6), (loss, ref)

    # Exercise the multi-tile / 2-core grid path with a small tile override.
    loss2 = rmsle_loss(y_pred, y_true, max_tile_rows=8)
    jax.block_until_ready(loss2)
    assert jnp.allclose(loss2, ref, rtol=1e-5, atol=1e-6), (loss2, ref)

    # Exercise the zero-padded + ragged-last-block (row-masked) path.
    shape3 = (2, 4, 16, 20)   # 2560 elements -> padded to 3072, ragged last tile
    y_pred3 = jax.random.normal(k3, shape3, dtype=jnp.float32) * 2.0
    y_true3 = jax.random.uniform(k4, shape3, dtype=jnp.float32, minval=0.0, maxval=5.0)
    loss3 = rmsle_loss(y_pred3, y_true3, max_tile_rows=16)
    jax.block_until_ready(loss3)
    ref3 = _reference(y_pred3, y_true3)
    assert jnp.allclose(loss3, ref3, rtol=1e-5, atol=1e-6), (loss3, ref3)

    print("KERNEL_OK")
</pallas_src>

<mosaic_0001>
module attributes {stable_mosaic.version = 11 : i64} {
  func.func @rmsle_kernel(%arg0: i32, %arg1: i32, %arg2: memref<16x128xf32, #tpu.memory_space<vmem>>, %arg3: memref<16x128xf32, #tpu.memory_space<vmem>>, %arg4: memref<8x128xf32, #tpu.memory_space<vmem>>) attributes {dimension_semantics = [#tpu.dimension_semantics<parallel>, #tpu.dimension_semantics<arbitrary>], iteration_bounds = array<i64: 1, 1>, scalar_prefetch = 0 : i64, scratch_operands = 0 : i64, tpu.core_type = #tpu.core_type<tc>, window_params = [{transform_indices = @transform_0, window_bounds = array<i64: 16, 128>}, {transform_indices = @transform_1, window_bounds = array<i64: 16, 128>}, {transform_indices = @transform_2, window_bounds = array<i64: 8, 128>}]} {
    %c0_i32 = arith.constant 0 : i32
    %0 = arith.cmpi eq, %arg1, %c0_i32 : i32
    %1 = arith.extui %0 : i1 to i32
    %c0_i32_0 = arith.constant 0 : i32
    %2 = arith.cmpi ne, %1, %c0_i32_0 : i32
    scf.if %2 {
      %cst_9 = arith.constant 0.000000e+00 : f32
      %16 = vector.broadcast %cst_9 : f32 to vector<8x128xf32>
      %c0_10 = arith.constant 0 : index
      %c0_11 = arith.constant 0 : index
      %17 = vector.load %arg4[%c0_10, %c0_11] : memref<8x128xf32, #tpu.memory_space<vmem>>, vector<8x128xf32>
      tpu.vector_store %arg4[%c0_10, %c0_11], %16 {strides = array<i32>} : memref<8x128xf32, #tpu.memory_space<vmem>>, vector<8x128xf32>,
    } else {
    }
    %c0 = arith.constant 0 : index
    %c0_1 = arith.constant 0 : index
    %3 = vector.load %arg2[%c0, %c0_1] : memref<16x128xf32, #tpu.memory_space<vmem>>, vector<16x128xf32>
    %cst = arith.constant 0.000000e+00 : f32
    %4 = vector.broadcast %cst : f32 to vector<16x128xf32>
    %5 = arith.maximumf %3, %4 : vector<16x128xf32>
    %6 = math.log1p %5 : vector<16x128xf32>
    %c0_2 = arith.constant 0 : index
    %c0_3 = arith.constant 0 : index
    %7 = vector.load %arg3[%c0_2, %c0_3] : memref<16x128xf32, #tpu.memory_space<vmem>>, vector<16x128xf32>
    %8 = math.log1p %7 : vector<16x128xf32>
    %9 = arith.subf %6, %8 : vector<16x128xf32>
    %10 = arith.mulf %9, %9 : vector<16x128xf32>
    %c0_4 = arith.constant 0 : index
    %c0_5 = arith.constant 0 : index
    %11 = vector.load %arg4[%c0_4, %c0_5] : memref<8x128xf32, #tpu.memory_space<vmem>>, vector<8x128xf32>
    %12 = vector.shape_cast %10 : vector<16x128xf32> to vector<2x8x128xf32>
    %cst_6 = arith.constant dense<0.000000e+00> : vector<8x128xf32>
    %13 = vector.multi_reduction <add>, %12, %cst_6 [0] : vector<2x8x128xf32> to vector<8x128xf32>
    %14 = arith.addf %11, %13 : vector<8x128xf32>
    %c0_7 = arith.constant 0 : index
    %c0_8 = arith.constant 0 : index
    %15 = vector.load %arg4[%c0_7, %c0_8] : memref<8x128xf32, #tpu.memory_space<vmem>>, vector<8x128xf32>
    tpu.vector_store %arg4[%c0_7, %c0_8], %14 {strides = array<i32>} : memref<8x128xf32, #tpu.memory_space<vmem>>, vector<8x128xf32>,
    return
  }
  func.func @transform_0(%arg0: i32, %arg1: i32) -> (i32, i32) {
    %c1_i32 = arith.constant 1 : i32
    %0 = arith.muli %arg0, %c1_i32 : i32
    %1 = arith.addi %0, %arg1 : i32
    %c0_i32 = arith.constant 0 : i32
    %c0_i32_0 = arith.constant 0 : i32
    return %1, %c0_i32 : i32, i32
  }
  func.func @transform_1(%arg0: i32, %arg1: i32) -> (i32, i32) {
    %c1_i32 = arith.constant 1 : i32
    %0 = arith.muli %arg0, %c1_i32 : i32
    %1 = arith.addi %0, %arg1 : i32
    %c0_i32 = arith.constant 0 : i32
    %c0_i32_0 = arith.constant 0 : i32
    return %1, %c0_i32 : i32, i32
  }
  func.func @transform_2(%arg0: i32, %arg1: i32) -> (i32, i32) {
    %c0_i32 = arith.constant 0 : i32
    %c0_i32_0 = arith.constant 0 : i32
    return %arg0, %c0_i32 : i32, i32
  }
}

</mosaic_0001>

<llo_original>
// kernel: tpu_custom_call.1
$region0: #{tpu_custom_call.1}
  #allocation0 [shape = 'u32[]', space=smem, size = 0x4, offset = 0x4, fixed_abs, tag = 'smem constant byte address 0x4 - core index']
  #allocation1 [shape = 'u32[144,128]{1,0:T(1,128)}', space=vmem, size = 0x12000, scoped, tag = 'internal scratch']
  %s0 = inlined_call_operand.hbm [shape: f32[16,128], index: 0, kind: input, shape index: {}]
  %s1 = inlined_call_operand.hbm [shape: f32[16,128], index: 1, kind: input, shape index: {}]
  %s2 = inlined_call_operand.hbm [shape: f32[8,128], index: 2, kind: output, shape index: {}]
  %s3 = sld [smem:[#allocation0]]
  $region30: #{tpu_custom_call.1} parent=0
    _
  %s5 = ssub.s32 1, %s3
  %s6 = scalar_select 0, %s5, %s3
  $region1: #{tpu_custom_call.1} parent=0
    #allocation2 [shape = 'u8[8192]{0}', space=vmem, size = 0x2000, scoped, tag = 'input window, operand 0, single buffered']
    #allocation3 [shape = 's32[1]{0}', space=sflag, size = 0x4, scoped, tag = 'scoped memory for tpu_custom_call.1']
    #allocation4 [shape = 's32[1]{0}', space=sflag, size = 0x4, scoped, tag = 'scoped memory for tpu_custom_call.1']
    #allocation5 [shape = 'u8[8192]{0}', space=vmem, size = 0x2000, scoped, tag = 'input window, operand 1, single buffered']
    #allocation6 [shape = 's32[1]{0}', space=sflag, size = 0x4, scoped, tag = 'scoped memory for tpu_custom_call.1']
    #allocation7 [shape = 'u8[4096]{0}', space=vmem, size = 0x1000, scoped, tag = 'output window, operand 0, single buffered']
    %7 = vsyncpa [#allocation3], 0
    %8 = vsyncpa [#allocation6], 0
    %9 = vsyncpa [#allocation4], 0
    // Predicated region
    $region2: #{tpu_custom_call.1} parent=1 // pred_check
      _
    $region3: #{tpu_custom_call.1} parent=1 // pred_check_branch
      %11 = sbr.rel (0) target = $region5
    $region4: #{tpu_custom_call.1} parent=1 // pred_region
      %s12 = sadd.s32 0, 0
      %s13 = smul.u32 2, %s12
      %s15 = ssub.s32 256, 256
      %16 = vsyncadd [#allocation3], %s15
      %s17 = smul.addr %s13, 128
      %s18 = scalar_lea.hbm %s0, %s17
      %s19 = sshll.u32 [#allocation2], 4
      %s20 = int_to_ptr.vmem [resolvable:$true] %s19
      %25 = dma.hbm_to_vmem [thread:$0]  %s18, 256, %s20, [#allocation3], 128, 128, 8
    $region5: #{tpu_custom_call.1} parent=1 // pred_fallthru
      _
    // Predicated region
    $region6: #{tpu_custom_call.1} parent=1 // pred_check
      _
    $region7: #{tpu_custom_call.1} parent=1 // pred_check_branch
      %27 = sbr.rel (0) target = $region9
    $region8: #{tpu_custom_call.1} parent=1 // pred_region
      %s28 = sadd.s32 0, 0
      %s29 = smul.u32 2, %s28
      %s31 = ssub.s32 256, 256
      %32 = vsyncadd [#allocation6], %s31
      %s33 = smul.addr %s29, 128
      %s34 = scalar_lea.hbm %s1, %s33
      %s35 = sshll.u32 [#allocation5], 4
      %s36 = int_to_ptr.vmem [resolvable:$true] %s35
      %41 = dma.hbm_to_vmem [thread:$0]  %s34, 256, %s36, [#allocation6], 128, 128, 8
    $region9: #{tpu_custom_call.1} parent=1 // pred_fallthru
      _
    // Predicated region
    $region10: #{tpu_custom_call.1} parent=1 // pred_check
      _
    $region11: #{tpu_custom_call.1} parent=1 // pred_check_branch
      %43 = sbr.rel (0) target = $region13
    $region12: #{tpu_custom_call.1} parent=1 // pred_region
      %44 = dma.done [#allocation3], 256
    $region13: #{tpu_custom_call.1} parent=1 // pred_fallthru
      _
    // Predicated region
    $region14: #{tpu_custom_call.1} parent=1 // pred_check
      _
    $region15: #{tpu_custom_call.1} parent=1 // pred_check_branch
      %46 = sbr.rel (0) target = $region17
    $region16: #{tpu_custom_call.1} parent=1 // pred_region
      %47 = dma.done [#allocation6], 256
    $region17: #{tpu_custom_call.1} parent=1 // pred_fallthru
      _
    %s48 = sadd.s32 0, 0
    %s49 = smul.u32 2, %s48
    %s50 = sadd.s32 0, 0
    %s51 = smul.u32 2, %s50
    %p52 = scmp.eq.s32.totalorder 0, 0
    // Predicated region
    $region18: #{tpu_custom_call.1} parent=1 // pred_check
      %p53 = pneg %p52
    $region19: #{tpu_custom_call.1} parent=1 // pred_check_branch
      %55 = sbr.rel (%p53) target = $region21
    $region20: #{tpu_custom_call.1} parent=1 // pred_region
      %56 = vst [vmem:[#allocation7] sm:$0xff] 0.0
    $region21: #{tpu_custom_call.1} parent=1 // pred_fallthru
      _
    %v57 = vld [vmem:[#allocation2] sm:$0xff]
    %v58 = vld [vmem:[#allocation2 + $0x8] sm:$0xff]
    %v59 = vmax.f32 %v57, 0.0
    %v60 = vmax.f32 %v58, 0.0
    %v61 = vadd.f32 %v59, 1.0
    %v62 = vlog2.pop %v61
    %v63 = vmul.f32 %v62, 0.6931472
    %v64 = vmul.f32 -0.5, %v59
    %v65 = vadd.f32 %v64, 1.0
    %v66 = vmul.f32 %v65, %v59
    %v67 = vand.u32 2147483647, %v59
    %vm68 = vcmp.lt.f32.partialorder %v67, 0.0004427343
    %v69 = vsel %vm68, %v66, %v63
    %v70 = vadd.f32 %v60, 1.0
    %v71 = vlog2.pop %v70
    %v72 = vmul.f32 %v71, 0.6931472
    %v73 = vmul.f32 -0.5, %v60
    %v74 = vadd.f32 %v73, 1.0
    %v75 = vmul.f32 %v74, %v60
    %v76 = vand.u32 2147483647, %v60
    %vm77 = vcmp.lt.f32.partialorder %v76, 0.0004427343
    %v78 = vsel %vm77, %v75, %v72
    %v79 = vld [vmem:[#allocation5] sm:$0xff]
    %v80 = vld [vmem:[#allocation5 + $0x8] sm:$0xff]
    %v81 = vadd.f32 %v79, 1.0
    %v82 = vlog2.pop %v81
    %v83 = vmul.f32 %v82, 0.6931472
    %v84 = vmul.f32 -0.5, %v79
    %v85 = vadd.f32 %v84, 1.0
    %v86 = vmul.f32 %v85, %v79
    %v87 = vand.u32 2147483647, %v79
    %vm88 = vcmp.lt.f32.partialorder %v87, 0.0004427343
    %v89 = vsel %vm88, %v86, %v83
    %v90 = vadd.f32 %v80, 1.0
    %v91 = vlog2.pop %v90
    %v92 = vmul.f32 %v91, 0.6931472
    %v93 = vmul.f32 -0.5, %v80
    %v94 = vadd.f32 %v93, 1.0
    %v95 = vmul.f32 %v94, %v80
    %v96 = vand.u32 2147483647, %v80
    %vm97 = vcmp.lt.f32.partialorder %v96, 0.0004427343
    %v98 = vsel %vm97, %v95, %v92
    %v99 = vsub.f32 %v69, %v89
    %v100 = vsub.f32 %v78, %v98
    %v101 = vmul.f32 %v99, %v99
    %v102 = vmul.f32 %v100, %v100
    %v103 = vld [vmem:[#allocation7] sm:$0xff]
    %v104 = vadd.f32 %v101, %v102
    %v105 = vadd.f32 %v103, %v104
    %106 = vst [vmem:[#allocation7] sm:$0xff] %v105
    // Predicated region
    $region22: #{tpu_custom_call.1} parent=1 // pred_check
      _
    $region23: #{tpu_custom_call.1} parent=1 // pred_check_branch
      %108 = sbr.rel (0) target = $region25
    $region24: #{tpu_custom_call.1} parent=1 // pred_region
      %s110 = ssub.s32 128, 128
      %111 = vsyncadd [#allocation4], %s110
      %s113 = sshll.u32 [#allocation7], 4
      %s114 = int_to_ptr.vmem [resolvable:$true] %s113
      %116 = dma.vmem_to_hbm [thread:$0]  %s114, 128, %s2, [#allocation4]
    $region25: #{tpu_custom_call.1} parent=1 // pred_fallthru
      _
    // Predicated region
    $region26: #{tpu_custom_call.1} parent=1 // pred_check
      _
    $region27: #{tpu_custom_call.1} parent=1 // pred_check_branch
      %118 = sbr.rel (0) target = $region29
    $region28: #{tpu_custom_call.1} parent=1 // pred_region
      %119 = dma.done [#allocation4], 128
    $region29: #{tpu_custom_call.1} parent=1 // pred_fallthru
      _
    %120 = vsyncpa [#allocation3], 1
    %121 = vsyncpa [#allocation6], 1
    %122 = vsyncpa [#allocation4], 1

</llo_original>
